<compile_context>
chip_gen: v7x
topology: tpu7x:2x2x1
jax: 0.10.0
libtpu: 0.0.40
codegen_flags: <defaults>
</compile_context>

<pallas_src>
import jax
import jax.numpy as jnp
from jax.experimental import pallas as pl
from jax.experimental.pallas import tpu as pltpu

_LANE = 128  # lane width; batch tiles are multiples of this


def _fused_kernel(w_ref, c_ref, x_ref, o_ref):
    # w_ref: (10, 1) VMEM (resident), c_ref: (1, 1) SMEM scalar,
    # x_ref: (10, TILE_B) VMEM, o_ref: (1, TILE_B) VMEM (lane-dense).
    prod = w_ref[...] * x_ref[...]                      # (10, TILE_B)  VPU broadcast-mul
    y = jnp.sum(prod, axis=0, keepdims=True)            # (1, TILE_B)   sublane reduce (XLU)
    o_ref[...] = jnp.maximum(y + c_ref[0, 0], 0.0)      # bias + relu, full-lane store


def _fused_kernel_with_t(w_ref, c_ref, x_ref, t_ref, o_ref):
    prod = w_ref[...] * x_ref[...]
    y = jnp.sum(prod, axis=0, keepdims=True)
    o_ref[...] = jnp.maximum(y + c_ref[0, 0] + t_ref[...], 0.0)


def model_forward(x, w1, b1, w2, b2, t=None, *, tile_b=2048):
    """Forward pass of the module.

    x  : (B, 10) f32
    w1 : (10, 16) pre-transposed (in, out);  b1 : (1, 16)
    w2 : (32, 1)  pre-transposed (in, out);  b2 : (1, 1)
    t  : optional additive term (scalar, (1,1) or (B,1))
    returns (B, 1) f32
    """
    x = jnp.asarray(x, jnp.float32)
    B, K = x.shape
    assert K == 10

    # ---- algebraic fusion (wrapper-side, tiny) ---------------------------
    w2_sum = w2[:16, :] + w2[16:, :]                 # (16, 1)
    w_fused = (w1 @ w2_sum).astype(jnp.float32)      # (10, 1)
    c_fused = (b1 @ w2_sum + b2).reshape(1, 1).astype(jnp.float32)  # (1, 1)

    # ---- lane-dense, padded, transposed batch layout ---------------------
    b_pad = max(_LANE, ((B + _LANE - 1) // _LANE) * _LANE)
    tile = min(tile_b, b_pad)
    b_pad = ((b_pad + tile - 1) // tile) * tile
    n_tiles = b_pad // tile

    x_t = jnp.zeros((K, b_pad), jnp.float32).at[:, :B].set(x.T)   # (10, B_pad)

    w_spec = pl.BlockSpec((K, 1), lambda i: (0, 0))               # resident across grid
    c_spec = pl.BlockSpec(memory_space=pltpu.MemorySpace.SMEM)    # scalar bias in SMEM
    x_spec = pl.BlockSpec((K, tile), lambda i: (0, i))
    o_spec = pl.BlockSpec((1, tile), lambda i: (0, i))

    cparams = pltpu.CompilerParams(dimension_semantics=("parallel",))

    if t is None:
        out_t = pl.pallas_call(
            _fused_kernel,
            out_shape=jax.ShapeDtypeStruct((1, b_pad), jnp.float32),
            grid=(n_tiles,),
            in_specs=[w_spec, c_spec, x_spec],
            out_specs=o_spec,
            compiler_params=cparams,
        )(w_fused, c_fused, x_t)
    else:
        t_arr = jnp.broadcast_to(jnp.asarray(t, jnp.float32), (B, 1))
        t_t = jnp.zeros((1, b_pad), jnp.float32).at[:, :B].set(t_arr.T)
        t_spec = pl.BlockSpec((1, tile), lambda i: (0, i))
        out_t = pl.pallas_call(
            _fused_kernel_with_t,
            out_shape=jax.ShapeDtypeStruct((1, b_pad), jnp.float32),
            grid=(n_tiles,),
            in_specs=[w_spec, c_spec, x_spec, t_spec],
            out_specs=o_spec,
            compiler_params=cparams,
        )(w_fused, c_fused, x_t, t_t)

    return out_t[:, :B].T                              # back to (B, 1)


def init_params(key):
    """Deterministic init mimicking torch.nn.Linear's U(-1/sqrt(fan_in), +)."""
    k1, k2, k3, k4 = jax.random.split(key, 4)
    bound1 = 1.0 / jnp.sqrt(10.0)
    bound2 = 1.0 / jnp.sqrt(32.0)
    w1 = jax.random.uniform(k1, (10, 16), jnp.float32, -bound1, bound1)
    b1 = jax.random.uniform(k2, (1, 16), jnp.float32, -bound1, bound1)
    w2 = jax.random.uniform(k3, (32, 1), jnp.float32, -bound2, bound2)
    b2 = jax.random.uniform(k4, (1, 1), jnp.float32, -bound2, bound2)
    return w1, b1, w2, b2


if __name__ == "__main__":
    key = jax.random.PRNGKey(0)
    kx, kp = jax.random.split(key)

    B = 2                                    # small batch; module used (1, 10)
    x = jax.random.normal(kx, (B, 10), jnp.float32)
    w1, b1, w2, b2 = init_params(kp)

    # pure-JAX reference (mirrors the unfused torch forward)
    v1 = x @ w1 + b1
    v2 = jnp.concatenate([v1, v1], axis=1)
    ref = jnp.maximum(v2 @ w2 + b2, 0.0)

    out = jax.block_until_ready(model_forward(x, w1, b1, w2, b2, t=None))
    assert out.shape == (B, 1)
    assert jnp.allclose(out, ref, atol=1e-5), "mismatch vs reference (t=None)"

    # also exercise the optional `t` branch
    t = jax.random.normal(jax.random.PRNGKey(1), (B, 1), jnp.float32)
    ref_t = jnp.maximum(v2 @ w2 + b2 + t, 0.0)
    out_t = jax.block_until_ready(model_forward(x, w1, b1, w2, b2, t=t))
    assert jnp.allclose(out_t, ref_t, atol=1e-5), "mismatch vs reference (with t)"

    print("KERNEL_OK")
</pallas_src>

<mosaic_0001>
module attributes {stable_mosaic.version = 11 : i64} {
  func.func @_fused_kernel(%arg0: i32, %arg1: memref<10x1xf32, #tpu.memory_space<vmem>>, %arg2: memref<1x1xf32, #tpu.memory_space<smem>>, %arg3: memref<10x128xf32, #tpu.memory_space<vmem>>, %arg4: memref<1x128xf32, #tpu.memory_space<vmem>>) attributes {dimension_semantics = [#tpu.dimension_semantics<parallel>], iteration_bounds = array<i64: 1>, scalar_prefetch = 0 : i64, scratch_operands = 0 : i64, tpu.core_type = #tpu.core_type<tc>, window_params = [{pipeline_mode = #tpu.pipeline_mode<synchronous>, transform_indices = @transform_0, window_bounds = array<i64: 10, 1>}, {transform_indices = @transform_1, window_bounds = array<i64: 1, 1>}, {transform_indices = @transform_2, window_bounds = array<i64: 10, 128>}, {transform_indices = @transform_3, window_bounds = array<i64: 1, 128>}]} {
    %c0 = arith.constant 0 : index
    %c0_0 = arith.constant 0 : index
    %0 = vector.load %arg1[%c0, %c0_0] : memref<10x1xf32, #tpu.memory_space<vmem>>, vector<10x1xf32>
    %c0_1 = arith.constant 0 : index
    %c0_2 = arith.constant 0 : index
    %1 = vector.load %arg3[%c0_1, %c0_2] : memref<10x128xf32, #tpu.memory_space<vmem>>, vector<10x128xf32>
    %2 = vector.broadcast %0 : vector<10x1xf32> to vector<10x128xf32>
    %3 = arith.mulf %2, %1 : vector<10x128xf32>
    %cst = arith.constant dense<0.000000e+00> : vector<128xf32>
    %4 = vector.multi_reduction <add>, %3, %cst [0] : vector<10x128xf32> to vector<128xf32>
    %5 = vector.shape_cast %4 : vector<128xf32> to vector<1x128xf32>
    %c0_3 = arith.constant 0 : index
    %c0_4 = arith.constant 0 : index
    %6 = memref.load %arg2[%c0_3, %c0_4] : memref<1x1xf32, #tpu.memory_space<smem>>
    %7 = vector.broadcast %6 : f32 to vector<1x128xf32>
    %8 = arith.addf %5, %7 : vector<1x128xf32>
    %cst_5 = arith.constant 0.000000e+00 : f32
    %9 = vector.broadcast %cst_5 : f32 to vector<1x128xf32>
    %10 = arith.maximumf %8, %9 : vector<1x128xf32>
    %c0_6 = arith.constant 0 : index
    %c0_7 = arith.constant 0 : index
    %11 = vector.load %arg4[%c0_6, %c0_7] : memref<1x128xf32, #tpu.memory_space<vmem>>, vector<1x128xf32>
    tpu.vector_store %arg4[%c0_6, %c0_7], %10 {strides = array<i32>} : memref<1x128xf32, #tpu.memory_space<vmem>>, vector<1x128xf32>,
    return
  }
  func.func @transform_0(%arg0: i32) -> (i32, i32) {
    %c0_i32 = arith.constant 0 : i32
    %c0_i32_0 = arith.constant 0 : i32
    %c0_i32_1 = arith.constant 0 : i32
    return %c0_i32, %c0_i32_0 : i32, i32
  }
  func.func @transform_1(%arg0: i32) -> (i32, i32) {
    %c0_i32 = arith.constant 0 : i32
    %c0_i32_0 = arith.constant 0 : i32
    %c0_i32_1 = arith.constant 0 : i32
    return %c0_i32, %c0_i32_0 : i32, i32
  }
  func.func @transform_2(%arg0: i32) -> (i32, i32) {
    %c0_i32 = arith.constant 0 : i32
    %c0_i32_0 = arith.constant 0 : i32
    return %c0_i32, %arg0 : i32, i32
  }
  func.func @transform_3(%arg0: i32) -> (i32, i32) {
    %c0_i32 = arith.constant 0 : i32
    %c0_i32_0 = arith.constant 0 : i32
    return %c0_i32, %arg0 : i32, i32
  }
}

</mosaic_0001>

<llo_original>
// kernel: tpu_custom_call.1
$region0: #{tpu_custom_call.1}
  #allocation0 [shape = 'u32[]', space=smem, size = 0x4, offset = 0x4, fixed_abs, tag = 'smem constant byte address 0x4 - core index']
  #allocation1 [shape = 'u32[144,128]{1,0:T(1,128)}', space=vmem, size = 0x12000, scoped, tag = 'internal scratch']
  #allocation2 [shape = 'f32[1,1]{1,0:T(1,128)S(6)}', space=smem, size = 0x200, scoped, tag = 'scoped memory for tpu_custom_call.1']
  %s0 = inlined_call_operand.vmem [shape: f32[10,1], index: 0, kind: input, shape index: {}]
  %s1 = inlined_call_operand.<no memory space> [shape: f32[1,1], index: 1, kind: input, shape index: {}]
  %s2 = inlined_call_operand.vmem [shape: f32[10,128], index: 2, kind: input, shape index: {}]
  %s3 = inlined_call_operand.hbm [shape: f32[1,128], index: 3, kind: output, shape index: {}]
  %s4 = sld [smem:[#allocation0]]
  $region22: #{tpu_custom_call.1} parent=0
    _
  %s6 = ssub.s32 1, %s4
  %s7 = scalar_select 0, %s6, %s4
  %8 = sst [smem:[#allocation2]] %s1
  $region1: #{tpu_custom_call.1} parent=0
    #allocation3 [shape = 'u8[512]{0}', space=vmem, size = 0x400, scoped, tag = 'output window, operand 0, single buffered']
    #allocation4 [shape = 's32[1]{0}', space=sflag, size = 0x4, scoped, tag = 'scoped memory for tpu_custom_call.1']
    %9 = vsyncpa [#allocation4], 0
    // Predicated region
    $region2: #{tpu_custom_call.1} parent=1 // pred_check
      _
    $region3: #{tpu_custom_call.1} parent=1 // pred_check_branch
      %11 = sbr.rel (0) target = $region5
    $region4: #{tpu_custom_call.1} parent=1 // pred_region
      _
    $region5: #{tpu_custom_call.1} parent=1 // pred_fallthru
      _
    // Predicated region
    $region6: #{tpu_custom_call.1} parent=1 // pred_check
      _
    $region7: #{tpu_custom_call.1} parent=1 // pred_check_branch
      %13 = sbr.rel (0) target = $region9
    $region8: #{tpu_custom_call.1} parent=1 // pred_region
      _
    $region9: #{tpu_custom_call.1} parent=1 // pred_fallthru
      _
    // Predicated region
    $region10: #{tpu_custom_call.1} parent=1 // pred_check
      _
    $region11: #{tpu_custom_call.1} parent=1 // pred_check_branch
      %15 = sbr.rel (0) target = $region13
    $region12: #{tpu_custom_call.1} parent=1 // pred_region
      _
    $region13: #{tpu_custom_call.1} parent=1 // pred_fallthru
      _
    %v16 = vld [vmem:[%s0] sm:$0xff]
    %v17 = vld [vmem:[%s0 + $0x8] sm:$0x3]
    %v18 = vld [vmem:[%s2] sm:$0xff]
    %v19 = vld [vmem:[%s2 + $0x8] sm:$0x3]
    %21 = vset.pattern.permute.xlu0 0
    %22 = vperm.xlu0 %21, %v16
    %v23 = vpop.permute.xlu0 %22
    %26 = vset.pattern.permute.xlu0 0
    %27 = vperm.xlu0 %26, %v17
    %v28 = vpop.permute.xlu0 %27
    %v30 = vmul.f32 %v23, %v18
    %v31 = vmul.f32 %v28, %v19
    %vm32 = vcmask 1041408
    %v33 = vsel %vm32, %v31, 0.0
    %v34 = vadd.f32 %v30, %v33
    %v35 = vrot.slane %v34, 4
    %v36 = vadd.f32 %v34, %v35
    %v37 = vrot.slane %v36, 2
    %v38 = vadd.f32 %v36, %v37
    %v39 = vrot.slane %v38, 1
    %v40 = vadd.f32 %v38, %v39
    %s41 = sld [smem:[#allocation2]]
    %v42 = vstv %s41
    %v43 = vadd.f32 %v40, %v42
    %v44 = vmax.f32 %v43, 0.0
    %45 = vst [vmem:[#allocation3] sm:$0x1] %v44
    // Predicated region
    $region14: #{tpu_custom_call.1} parent=1 // pred_check
      _
    $region15: #{tpu_custom_call.1} parent=1 // pred_check_branch
      %47 = sbr.rel (0) target = $region17
    $region16: #{tpu_custom_call.1} parent=1 // pred_region
      %s49 = ssub.s32 16, 16
      %50 = vsyncadd [#allocation4], %s49
      %s52 = sshll.u32 [#allocation3], 4
      %s53 = int_to_ptr.vmem [resolvable:$true] %s52
      %55 = dma.vmem_to_hbm [thread:$0]  %s53, 16, %s3, [#allocation4]
    $region17: #{tpu_custom_call.1} parent=1 // pred_fallthru
      _
    // Predicated region
    $region18: #{tpu_custom_call.1} parent=1 // pred_check
      _
    $region19: #{tpu_custom_call.1} parent=1 // pred_check_branch
      %57 = sbr.rel (0) target = $region21
    $region20: #{tpu_custom_call.1} parent=1 // pred_region
      %58 = dma.done [#allocation4], 16
    $region21: #{tpu_custom_call.1} parent=1 // pred_fallthru
      _
    %59 = vsyncpa [#allocation4], 1

</llo_original>
